<compile_context>
chip_gen: v6e
topology: v6e:2x2x1
jax: 0.10.0
libtpu: 0.0.40
codegen_flags: <defaults>
</compile_context>

<pallas_src>
import functools

import jax
import jax.numpy as jnp
from jax.experimental import pallas as pl
from jax.experimental.pallas import tpu as pltpu

COL_SIZE = 5        # input_size
HIDDEN1 = 300       # hidden_layer_size
HIDDEN2 = 200
OUT_SIZE = 3        # output_size
NEG_SLOPE = 0.01    # nn.LeakyReLU default negative_slope

H1_P = 384          # round_up(300, 128)
H2_P = 256          # round_up(200, 128)
OUT_P = 128         # round_up(3, 128) -- only for the resident w3/b3 tiles


def _round_up(x, m):
    return (x + m - 1) // m * m


def _leaky_relu(x, neg_slope=NEG_SLOPE):
    return jnp.where(x >= 0, x, neg_slope * x)


def simpnn_kernel(x_ref, w1_ref, b1_ref, w2_ref, b2_ref, w3_ref, b3_ref, o_ref):
    # One batch tile per grid step.  Weights/biases have constant block indices,
    # so Pallas keeps them VMEM-resident across the whole batch grid.
    # Matmuls hit the MXU in bf16 with f32 accumulation; bias + LeakyReLU run in
    # f32 on the VPU.  Zero-padded weight columns stay zero through LeakyReLU and
    # contribute nothing downstream, so the padded lanes never leak into the output.
    x = x_ref[...].astype(jnp.bfloat16)                       # (TB, 5)

    h1 = jnp.dot(x, w1_ref[...], preferred_element_type=jnp.float32) + b1_ref[...]
    h1 = _leaky_relu(h1)
    # drop2 (p=0.02): identity in eval mode.

    h2 = jnp.dot(h1.astype(jnp.bfloat16), w2_ref[...],
                 preferred_element_type=jnp.float32) + b2_ref[...]
    h2 = _leaky_relu(h2)
    # drop1 (p=0.01): identity in eval mode.

    y = jnp.dot(h2.astype(jnp.bfloat16), w3_ref[...],
                preferred_element_type=jnp.float32) + b3_ref[...]
    o_ref[...] = y[:, :OUT_SIZE].astype(o_ref.dtype)          # (TB, 3)


def prepare_params(w1, b1, w2, b2, w3, b3):
    """One-time weight prep (hoisted out of the forward): pad + cast to bf16."""
    w1p = jnp.zeros((COL_SIZE, H1_P), jnp.bfloat16).at[:, :HIDDEN1].set(
        w1.astype(jnp.bfloat16))
    b1p = jnp.zeros((1, H1_P), jnp.float32).at[0, :HIDDEN1].set(b1)
    w2p = jnp.zeros((H1_P, H2_P), jnp.bfloat16).at[:HIDDEN1, :HIDDEN2].set(
        w2.astype(jnp.bfloat16))
    b2p = jnp.zeros((1, H2_P), jnp.float32).at[0, :HIDDEN2].set(b2)
    w3p = jnp.zeros((H2_P, OUT_P), jnp.bfloat16).at[:HIDDEN2, :OUT_SIZE].set(
        w3.astype(jnp.bfloat16))
    b3p = jnp.zeros((1, OUT_P), jnp.float32).at[0, :OUT_SIZE].set(b3)
    return w1p, b1p, w2p, b2p, w3p, b3p


@functools.partial(jax.jit, static_argnames=("block_b",))
def simpnn_forward(x, w1p, b1p, w2p, b2p, w3p, b3p, block_b=512):
    """x: (B, COL_SIZE) float32, params from prepare_params.  -> (B, OUT_SIZE)."""
    B = x.shape[0]
    TB = block_b if B >= block_b else _round_up(B, 8)
    Bp = _round_up(B, TB)

    # Only pad batch rows (and only when the batch isn't already a tile multiple).
    xp = x if Bp == B else jnp.zeros((Bp, COL_SIZE), x.dtype).at[:B].set(x)

    resident = lambda shape: pl.BlockSpec(shape, lambda i: (0, 0))

    flops = 2 * Bp * (COL_SIZE * HIDDEN1 + HIDDEN1 * HIDDEN2 + HIDDEN2 * OUT_SIZE)
    bytes_accessed = (xp.size * 4
                      + (w1p.size + w2p.size + w3p.size) * 2
                      + (b1p.size + b2p.size + b3p.size) * 4
                      + Bp * OUT_SIZE * 4)

    out_p = pl.pallas_call(
        simpnn_kernel,
        out_shape=jax.ShapeDtypeStruct((Bp, OUT_SIZE), jnp.float32),
        grid=(Bp // TB,),
        in_specs=[
            pl.BlockSpec((TB, COL_SIZE), lambda i: (i, 0)),   # x tile (last dim = full 5)
            resident((COL_SIZE, H1_P)), resident((1, H1_P)),
            resident((H1_P, H2_P)), resident((1, H2_P)),
            resident((H2_P, OUT_P)), resident((1, OUT_P)),
        ],
        out_specs=pl.BlockSpec((TB, OUT_SIZE), lambda i: (i, 0)),  # narrow (TB, 3) output
        compiler_params=pltpu.CompilerParams(
            dimension_semantics=("parallel",)),
        cost_estimate=pl.CostEstimate(
            flops=flops, transcendentals=0, bytes_accessed=bytes_accessed),
    )(xp, w1p, b1p, w2p, b2p, w3p, b3p)

    return out_p[:B]


def init_params(key):
    """Deterministic nn.Linear-style init: U(-1/sqrt(fan_in), 1/sqrt(fan_in))."""
    def linear(k, fan_in, fan_out):
        kw, kb = jax.random.split(k)
        bound = 1.0 / jnp.sqrt(float(fan_in))
        w = jax.random.uniform(kw, (fan_in, fan_out), jnp.float32, -bound, bound)
        b = jax.random.uniform(kb, (fan_out,), jnp.float32, -bound, bound)
        return w, b

    k1, k2, k3 = jax.random.split(key, 3)
    w1, b1 = linear(k1, COL_SIZE, HIDDEN1)
    w2, b2 = linear(k2, HIDDEN1, HIDDEN2)
    w3, b3 = linear(k3, HIDDEN2, OUT_SIZE)
    return w1, b1, w2, b2, w3, b3


def reference_forward(x, w1p, b1p, w2p, b2p, w3p, b3p):
    """f32 reference using the same (bf16-rounded, zero-padded) prepared weights."""
    h1 = _leaky_relu(x @ w1p.astype(jnp.float32) + b1p)
    h2 = _leaky_relu(h1 @ w2p.astype(jnp.float32) + b2p)
    y = h2 @ w3p.astype(jnp.float32) + b3p
    return y[:, :OUT_SIZE]


if __name__ == "__main__":
    key = jax.random.PRNGKey(0)
    k_params, k_x = jax.random.split(key)

    batch = 8
    x = jax.random.normal(k_x, (batch, COL_SIZE), jnp.float32)
    params = prepare_params(*init_params(k_params))

    out = simpnn_forward(x, *params)
    out = jax.block_until_ready(out)

    ref = reference_forward(x, *params)
    assert out.shape == (batch, OUT_SIZE), out.shape
    max_err = float(jnp.max(jnp.abs(out - ref)))
    assert jnp.allclose(out, ref, atol=3e-2, rtol=3e-2), max_err

    print("KERNEL_OK")
</pallas_src>

<mosaic_0001>
module attributes {stable_mosaic.version = 11 : i64} {
  func.func @simpnn_kernel(%arg0: i32, %arg1: memref<8x5xf32, #tpu.memory_space<vmem>>, %arg2: memref<5x384xbf16, #tpu.memory_space<vmem>>, %arg3: memref<1x384xf32, #tpu.memory_space<vmem>>, %arg4: memref<384x256xbf16, #tpu.memory_space<vmem>>, %arg5: memref<1x256xf32, #tpu.memory_space<vmem>>, %arg6: memref<256x128xbf16, #tpu.memory_space<vmem>>, %arg7: memref<1x128xf32, #tpu.memory_space<vmem>>, %arg8: memref<8x3xf32, #tpu.memory_space<vmem>>) attributes {dimension_semantics = [#tpu.dimension_semantics<parallel>], iteration_bounds = array<i64: 1>, scalar_prefetch = 0 : i64, scratch_operands = 0 : i64, tpu.core_type = #tpu.core_type<tc>, window_params = [{transform_indices = @transform_0, window_bounds = array<i64: 8, 5>}, {pipeline_mode = #tpu.pipeline_mode<synchronous>, transform_indices = @transform_1, window_bounds = array<i64: 5, 384>}, {pipeline_mode = #tpu.pipeline_mode<synchronous>, transform_indices = @transform_2, window_bounds = array<i64: 1, 384>}, {pipeline_mode = #tpu.pipeline_mode<synchronous>, transform_indices = @transform_3, window_bounds = array<i64: 384, 256>}, {pipeline_mode = #tpu.pipeline_mode<synchronous>, transform_indices = @transform_4, window_bounds = array<i64: 1, 256>}, {pipeline_mode = #tpu.pipeline_mode<synchronous>, transform_indices = @transform_5, window_bounds = array<i64: 256, 128>}, {pipeline_mode = #tpu.pipeline_mode<synchronous>, transform_indices = @transform_6, window_bounds = array<i64: 1, 128>}, {transform_indices = @transform_7, window_bounds = array<i64: 8, 3>}]} {
    %c0 = arith.constant 0 : index
    %c0_0 = arith.constant 0 : index
    %0 = vector.load %arg1[%c0, %c0_0] : memref<8x5xf32, #tpu.memory_space<vmem>>, vector<8x5xf32>
    %1 = arith.truncf %0 : vector<8x5xf32> to vector<8x5xbf16>
    %c0_1 = arith.constant 0 : index
    %c0_2 = arith.constant 0 : index
    %2 = vector.load %arg2[%c0_1, %c0_2] : memref<5x384xbf16, #tpu.memory_space<vmem>>, vector<5x384xbf16>
    %cst = arith.constant dense<0.000000e+00> : vector<8x384xf32>
    %3 = tpu.matmul %1, %2, %cst {dimension_numbers = #tpu.dot_dimension_numbers<[1], [0], [0], [1], [0, 0, 1, 1], [], []>} : vector<8x5xbf16>, vector<5x384xbf16>, vector<8x384xf32> -> vector<8x384xf32>
    %c0_3 = arith.constant 0 : index
    %c0_4 = arith.constant 0 : index
    %4 = vector.load %arg3[%c0_3, %c0_4] : memref<1x384xf32, #tpu.memory_space<vmem>>, vector<1x384xf32>
    %5 = vector.broadcast %4 : vector<1x384xf32> to vector<8x384xf32>
    %6 = arith.addf %3, %5 : vector<8x384xf32>
    %cst_5 = arith.constant 0.000000e+00 : f32
    %7 = vector.broadcast %cst_5 : f32 to vector<8x384xf32>
    %8 = arith.cmpf oge, %6, %7 : vector<8x384xf32>
    %cst_6 = arith.constant 0.00999999977 : f32
    %9 = vector.broadcast %cst_6 : f32 to vector<8x384xf32>
    %10 = arith.mulf %9, %6 : vector<8x384xf32>
    %11 = arith.select %8, %6, %10 : vector<8x384xi1>, vector<8x384xf32>
    %12 = arith.truncf %11 : vector<8x384xf32> to vector<8x384xbf16>
    %c0_7 = arith.constant 0 : index
    %c0_8 = arith.constant 0 : index
    %13 = vector.load %arg4[%c0_7, %c0_8] : memref<384x256xbf16, #tpu.memory_space<vmem>>, vector<384x256xbf16>
    %cst_9 = arith.constant dense<0.000000e+00> : vector<8x256xf32>
    %14 = tpu.matmul %12, %13, %cst_9 {dimension_numbers = #tpu.dot_dimension_numbers<[1], [0], [0], [1], [0, 0, 1, 1], [], []>} : vector<8x384xbf16>, vector<384x256xbf16>, vector<8x256xf32> -> vector<8x256xf32>
    %c0_10 = arith.constant 0 : index
    %c0_11 = arith.constant 0 : index
    %15 = vector.load %arg5[%c0_10, %c0_11] : memref<1x256xf32, #tpu.memory_space<vmem>>, vector<1x256xf32>
    %16 = vector.broadcast %15 : vector<1x256xf32> to vector<8x256xf32>
    %17 = arith.addf %14, %16 : vector<8x256xf32>
    %cst_12 = arith.constant 0.000000e+00 : f32
    %18 = vector.broadcast %cst_12 : f32 to vector<8x256xf32>
    %19 = arith.cmpf oge, %17, %18 : vector<8x256xf32>
    %cst_13 = arith.constant 0.00999999977 : f32
    %20 = vector.broadcast %cst_13 : f32 to vector<8x256xf32>
    %21 = arith.mulf %20, %17 : vector<8x256xf32>
    %22 = arith.select %19, %17, %21 : vector<8x256xi1>, vector<8x256xf32>
    %23 = arith.truncf %22 : vector<8x256xf32> to vector<8x256xbf16>
    %c0_14 = arith.constant 0 : index
    %c0_15 = arith.constant 0 : index
    %24 = vector.load %arg6[%c0_14, %c0_15] : memref<256x128xbf16, #tpu.memory_space<vmem>>, vector<256x128xbf16>
    %cst_16 = arith.constant dense<0.000000e+00> : vector<8x128xf32>
    %25 = tpu.matmul %23, %24, %cst_16 {dimension_numbers = #tpu.dot_dimension_numbers<[1], [0], [0], [1], [0, 0, 1, 1], [], []>} : vector<8x256xbf16>, vector<256x128xbf16>, vector<8x128xf32> -> vector<8x128xf32>
    %c0_17 = arith.constant 0 : index
    %c0_18 = arith.constant 0 : index
    %26 = vector.load %arg7[%c0_17, %c0_18] : memref<1x128xf32, #tpu.memory_space<vmem>>, vector<1x128xf32>
    %27 = vector.broadcast %26 : vector<1x128xf32> to vector<8x128xf32>
    %28 = arith.addf %25, %27 : vector<8x128xf32>
    %29 = vector.extract_strided_slice %28 {offsets = [0, 0], sizes = [8, 3], strides = [1, 1]} : vector<8x128xf32> to vector<8x3xf32>
    %c0_19 = arith.constant 0 : index
    %c0_20 = arith.constant 0 : index
    %30 = vector.load %arg8[%c0_19, %c0_20] : memref<8x3xf32, #tpu.memory_space<vmem>>, vector<8x3xf32>
    tpu.vector_store %arg8[%c0_19, %c0_20], %29 {strides = array<i32>} : memref<8x3xf32, #tpu.memory_space<vmem>>, vector<8x3xf32>,
    return
  }
  func.func @transform_0(%arg0: i32) -> (i32, i32) {
    %c0_i32 = arith.constant 0 : i32
    %c0_i32_0 = arith.constant 0 : i32
    return %arg0, %c0_i32 : i32, i32
  }
  func.func @transform_1(%arg0: i32) -> (i32, i32) {
    %c0_i32 = arith.constant 0 : i32
    %c0_i32_0 = arith.constant 0 : i32
    %c0_i32_1 = arith.constant 0 : i32
    return %c0_i32, %c0_i32_0 : i32, i32
  }
  func.func @transform_2(%arg0: i32) -> (i32, i32) {
    %c0_i32 = arith.constant 0 : i32
    %c0_i32_0 = arith.constant 0 : i32
    %c0_i32_1 = arith.constant 0 : i32
    return %c0_i32, %c0_i32_0 : i32, i32
  }
  func.func @transform_3(%arg0: i32) -> (i32, i32) {
    %c0_i32 = arith.constant 0 : i32
    %c0_i32_0 = arith.constant 0 : i32
    %c0_i32_1 = arith.constant 0 : i32
    return %c0_i32, %c0_i32_0 : i32, i32
  }
  func.func @transform_4(%arg0: i32) -> (i32, i32) {
    %c0_i32 = arith.constant 0 : i32
    %c0_i32_0 = arith.constant 0 : i32
    %c0_i32_1 = arith.constant 0 : i32
    return %c0_i32, %c0_i32_0 : i32, i32
  }
  func.func @transform_5(%arg0: i32) -> (i32, i32) {
    %c0_i32 = arith.constant 0 : i32
    %c0_i32_0 = arith.constant 0 : i32
    %c0_i32_1 = arith.constant 0 : i32
    return %c0_i32, %c0_i32_0 : i32, i32
  }
  func.func @transform_6(%arg0: i32) -> (i32, i32) {
    %c0_i32 = arith.constant 0 : i32
    %c0_i32_0 = arith.constant 0 : i32
    %c0_i32_1 = arith.constant 0 : i32
    return %c0_i32, %c0_i32_0 : i32, i32
  }
  func.func @transform_7(%arg0: i32) -> (i32, i32) {
    %c0_i32 = arith.constant 0 : i32
    %c0_i32_0 = arith.constant 0 : i32
    return %arg0, %c0_i32 : i32, i32
  }
}

</mosaic_0001>

<llo_original>
// kernel: simpnn_forward.1
$region0: #{simpnn_forward.1}
  #allocation0 [shape = 'u32[]', space=smem, size = 0x4, offset = 0x4, fixed_abs, tag = 'smem constant byte address 0x4 - core index']
  #allocation1 [shape = 'u32[144,128]{1,0:T(1,128)}', space=vmem, size = 0x12000, scoped, tag = 'internal scratch']
  %s0 = inlined_call_operand.hbm [shape: f32[8,5], index: 0, kind: input, shape index: {}]
  %s1 = inlined_call_operand.hbm [shape: bf16[5,384], index: 1, kind: input, shape index: {}]
  %s2 = inlined_call_operand.vmem [shape: f32[1,384], index: 2, kind: input, shape index: {}]
  %s3 = inlined_call_operand.hbm [shape: bf16[384,256], index: 3, kind: input, shape index: {}]
  %s4 = inlined_call_operand.vmem [shape: f32[1,256], index: 4, kind: input, shape index: {}]
  %s5 = inlined_call_operand.hbm [shape: bf16[256,128], index: 5, kind: input, shape index: {}]
  %s6 = inlined_call_operand.vmem [shape: f32[1,128], index: 6, kind: input, shape index: {}]
  %s7 = inlined_call_operand.vmem [shape: f32[8,3], index: 7, kind: output, shape index: {}]
  %s8 = sld [smem:[#allocation0]]
  $region54: #{simpnn_forward.1} parent=0
    _
  %s10 = ssub.s32 1, %s8
  %s11 = scalar_select 0, %s10, %s8
  $region1: #{simpnn_forward.1} parent=0
    #allocation2 [shape = 'u8[4096]{0}', space=vmem, size = 0x1000, scoped, tag = 'input window, operand 0, single buffered']
    #allocation3 [shape = 's32[1]{0}', space=sflag, size = 0x4, scoped, tag = 'scoped memory for simpnn_forward.1']
    #allocation4 [shape = 'u8[6144]{0}', space=vmem, size = 0x1800, scoped, tag = 'input window, operand 1, single buffered']
    #allocation5 [shape = 's32[1]{0}', space=sflag, size = 0x4, scoped, tag = 'scoped memory for simpnn_forward.1']
    #allocation6 [shape = 'u8[196608]{0}', space=vmem, size = 0x30000, scoped, tag = 'input window, operand 3, single buffered']
    #allocation7 [shape = 'u8[65536]{0}', space=vmem, size = 0x10000, scoped, tag = 'input window, operand 5, single buffered']
    #allocation8 [shape = 's32[1]{0}', space=sflag, size = 0x4, scoped, tag = 'scoped memory for simpnn_forward.1']
    %12 = vsyncpa [#allocation3], 0
    %13 = vsyncpa [#allocation5], 0
    %14 = vsyncpa [#allocation8], 0
    // Predicated region
    $region2: #{simpnn_forward.1} parent=1 // pred_check
      _
    $region3: #{simpnn_forward.1} parent=1 // pred_check_branch
      %16 = sbr.rel (0) target = $region5
    $region4: #{simpnn_forward.1} parent=1 // pred_region
      %s18 = ssub.s32 128, 128
      %19 = vsyncadd [#allocation3], %s18
      %s21 = sshll.u32 [#allocation2], 4
      %s22 = int_to_ptr.vmem [resolvable:$true] %s21
      %24 = dma.hbm_to_vmem [thread:$0]  %s0, 128, %s22, [#allocation3]
    $region5: #{simpnn_forward.1} parent=1 // pred_fallthru
      _
    // Predicated region
    $region6: #{simpnn_forward.1} parent=1 // pred_check
      _
    $region7: #{simpnn_forward.1} parent=1 // pred_check_branch
      %26 = sbr.rel (0) target = $region9
    $region8: #{simpnn_forward.1} parent=1 // pred_region
      %s28 = ssub.s32 192, 192
      %29 = vsyncadd [#allocation5], %s28
      %s31 = sshll.u32 [#allocation4], 4
      %s32 = int_to_ptr.vmem [resolvable:$true] %s31
      %34 = dma.hbm_to_vmem [thread:$0]  %s1, 192, %s32, [#allocation5]
    $region9: #{simpnn_forward.1} parent=1 // pred_fallthru
      _
    // Predicated region
    $region10: #{simpnn_forward.1} parent=1 // pred_check
      _
    $region11: #{simpnn_forward.1} parent=1 // pred_check_branch
      %36 = sbr.rel (0) target = $region13
    $region12: #{simpnn_forward.1} parent=1 // pred_region
      _
    $region13: #{simpnn_forward.1} parent=1 // pred_fallthru
      _
    // Predicated region
    $region14: #{simpnn_forward.1} parent=1 // pred_check
      _
    $region15: #{simpnn_forward.1} parent=1 // pred_check_branch
      %38 = sbr.rel (0) target = $region17
    $region16: #{simpnn_forward.1} parent=1 // pred_region
      %s40 = ssub.s32 6144, 6144
      %41 = vsyncadd [#allocation5], %s40
      %s42 = sshll.u32 [#allocation6], 4
      %s43 = int_to_ptr.vmem [resolvable:$true] %s42
      %48 = dma.hbm_to_vmem [thread:$0]  %s3, 6144, %s43, [#allocation5], 128, 128, 8
    $region17: #{simpnn_forward.1} parent=1 // pred_fallthru
      _
    // Predicated region
    $region18: #{simpnn_forward.1} parent=1 // pred_check
      _
    $region19: #{simpnn_forward.1} parent=1 // pred_check_branch
      %50 = sbr.rel (0) target = $region21
    $region20: #{simpnn_forward.1} parent=1 // pred_region
      _
    $region21: #{simpnn_forward.1} parent=1 // pred_fallthru
      _
    // Predicated region
    $region22: #{simpnn_forward.1} parent=1 // pred_check
      _
    $region23: #{simpnn_forward.1} parent=1 // pred_check_branch
      %52 = sbr.rel (0) target = $region25
    $region24: #{simpnn_forward.1} parent=1 // pred_region
      %s54 = ssub.s32 2048, 2048
      %55 = vsyncadd [#allocation8], %s54
      %s56 = sshll.u32 [#allocation7], 4
      %s57 = int_to_ptr.vmem [resolvable:$true] %s56
      %62 = dma.hbm_to_vmem [thread:$0]  %s5, 2048, %s57, [#allocation8], 64, 64, 4
    $region25: #{simpnn_forward.1} parent=1 // pred_fallthru
      _
    // Predicated region
    $region26: #{simpnn_forward.1} parent=1 // pred_check
      _
    $region27: #{simpnn_forward.1} parent=1 // pred_check_branch
      %64 = sbr.rel (0) target = $region29
    $region28: #{simpnn_forward.1} parent=1 // pred_region
      _
    $region29: #{simpnn_forward.1} parent=1 // pred_fallthru
      _
    // Predicated region
    $region30: #{simpnn_forward.1} parent=1 // pred_check
      _
    $region31: #{simpnn_forward.1} parent=1 // pred_check_branch
      %66 = sbr.rel (0) target = $region33
    $region32: #{simpnn_forward.1} parent=1 // pred_region
      %67 = dma.done [#allocation3], 128
    $region33: #{simpnn_forward.1} parent=1 // pred_fallthru
      _
    // Predicated region
    $region34: #{simpnn_forward.1} parent=1 // pred_check
      _
    $region35: #{simpnn_forward.1} parent=1 // pred_check_branch
      %69 = sbr.rel (0) target = $region37
    $region36: #{simpnn_forward.1} parent=1 // pred_region
      %70 = dma.done [#allocation5], 192
    $region37: #{simpnn_forward.1} parent=1 // pred_fallthru
      _
    // Predicated region
    $region38: #{simpnn_forward.1} parent=1 // pred_check
      _
    $region39: #{simpnn_forward.1} parent=1 // pred_check_branch
      %72 = sbr.rel (0) target = $region41
    $region40: #{simpnn_forward.1} parent=1 // pred_region
      %73 = dma.done [#allocation5], 6144
    $region41: #{simpnn_forward.1} parent=1 // pred_fallthru
      _
    // Predicated region
    $region42: #{simpnn_forward.1} parent=1 // pred_check
      _
    $region43: #{simpnn_forward.1} parent=1 // pred_check_branch
      %75 = sbr.rel (0) target = $region45
    $region44: #{simpnn_forward.1} parent=1 // pred_region
      %76 = dma.done [#allocation8], 2048
    $region45: #{simpnn_forward.1} parent=1 // pred_fallthru
      _
    %v78 = vld [vmem:[#allocation2] sm:$0xff]
    %v79 = vpack.c.bf16 %v78, %v78
    %v80 = vld [vmem:[#allocation4] sm:$0x77]
    %v81 = vld [vmem:[#allocation4 + $0x8] sm:$0x7]
    %v82 = vld [vmem:[%s2] sm:$0x7]
    %v84 = vlaneseq
    %v85 = vshrl.u32 %v84, 7
    %v86 = vsub.s32 0, %v85
    %v87 = vrot.slane %v82, %v86
    %v88 = vlaneseq
    %v89 = vshrl.u32 %v88, 7
    %v90 = vsub.s32 1, %v89
    %v91 = vrot.slane %v82, %v90
    %v92 = vlaneseq
    %v93 = vshrl.u32 %v92, 7
    %v94 = vsub.s32 2, %v93
    %v95 = vrot.slane %v82, %v94
    %v101 = vunpack.c.l.b16 %v80
    %v102 = vunpack.c.h.b16 %v80
    %v103 = vunpack.c.l.b16 %v81
    %v104 = vpack.c.b16 %v101, %v101
    %v105 = vpack.c.b16 %v102, %v102
    %v106 = vpack.c.b16 %v103, %v103
    %vm107 = vcmask 39936
    %v109 = vsel %vm107, %v79, 0
    %vm111 = vcmask 1041408
    %vm112 = vcmask 1042432
    %v113 = vsel %vm111, 4294967295, 65535
    %v114 = vsel %vm112, %v113, 0
    %v116 = vand.u32 %v104, %v114
    %v119 = vand.u32 %v105, %v114
    %v122 = vand.u32 %v106, %v114
    %124 = vmatprep.subr.bf16.mxu0 0
    %125 = vmatpush1.bf16.msra.mxu0 0
    %126 = vmatprep.subr.bf16.mxu0 0
    %127 = vmatpush1.bf16.msra.mxu0 0
    %128 = vmatprep.subr.bf16.mxu0 0
    %129 = vmatpush1.bf16.msra.mxu0 0
    %130 = vmatprep.subr.bf16.mxu0 0
    %131 = vmatpush1.bf16.msra.mxu0 0
    %132 = vmatprep.subr.bf16.mxu0 0
    %133 = vmatpush1.bf16.msra.mxu0 0
    %134 = vmatprep.subr.bf16.mxu0 0
    %135 = vmatpush1.bf16.msra.mxu0 0
    %136 = vmatprep.subr.bf16.mxu0 0
    %137 = vmatpush1.bf16.msra.mxu0 0
    %138 = vmatprep.subr.bf16.mxu0 %v119
    %139 = vmatpush1.bf16.msra.mxu0 %v116
    %140 = vmatprep.subr.bf16.mxu0 0
    %141 = vmatpush2.bf16.msra.mxu0 0
    %142 = vmatprep.subr.bf16.mxu0 0
    %143 = vmatpush2.bf16.msra.mxu0 0
    %144 = vmatprep.subr.bf16.mxu0 0
    %145 = vmatpush2.bf16.msra.mxu0 0
    %146 = vmatprep.subr.bf16.mxu0 0
    %147 = vmatpush2.bf16.msra.mxu0 0
    %148 = vmatprep.subr.bf16.mxu0 0
    %149 = vmatpush2.bf16.msra.mxu0 0
    %150 = vmatprep.subr.bf16.mxu0 0
    %151 = vmatpush2.bf16.msra.mxu0 0
    %152 = vmatprep.subr.bf16.mxu0 0
    %153 = vmatpush2.bf16.msra.mxu0 0
    %154 = vmatprep.subr.bf16.mxu0 0
    %155 = vmatpush2.bf16.msra.mxu0 0
    %156 = vmatprep.mubr.bf16.mxu0 0
    %157 = vmatmul.mubr.bf16.gmra.mxu0 %v109
    %v158 = vpop.f32.mrf.mxu0
    %v159 = vadd.f32 %v87, %v158
    %v160 = vpop.f32.mrf.mxu0
    %v161 = vadd.f32 %v91, %v160
    %v162 = vpop.f32.mrf.mxu0
    %v163 = vpop.f32.mrf.mxu0
    %164 = vdwg.mxu0
    %165 = vmatprep.subr.bf16.mxu0 0
    %166 = vmatpush1.bf16.msra.mxu0 0
    %167 = vmatprep.subr.bf16.mxu0 0
    %168 = vmatpush1.bf16.msra.mxu0 0
    %169 = vmatprep.subr.bf16.mxu0 0
    %170 = vmatpush1.bf16.msra.mxu0 0
    %171 = vmatprep.subr.bf16.mxu0 0
    %172 = vmatpush1.bf16.msra.mxu0 0
    %173 = vmatprep.subr.bf16.mxu0 0
    %174 = vmatpush1.bf16.msra.mxu0 0
    %175 = vmatprep.subr.bf16.mxu0 0
    %176 = vmatpush1.bf16.msra.mxu0 0
    %177 = vmatprep.subr.bf16.mxu0 0
    %178 = vmatpush1.bf16.msra.mxu0 0
    %179 = vmatprep.subr.bf16.mxu0 0
    %180 = vmatpush1.bf16.msra.mxu0 %v122
    %181 = vmatprep.subr.bf16.mxu0 0
    %182 = vmatpush2.bf16.msra.mxu0 0
    %183 = vmatprep.subr.bf16.mxu0 0
    %184 = vmatpush2.bf16.msra.mxu0 0
    %185 = vmatprep.subr.bf16.mxu0 0
    %186 = vmatpush2.bf16.msra.mxu0 0
    %187 = vmatprep.subr.bf16.mxu0 0
    %188 = vmatpush2.bf16.msra.mxu0 0
    %189 = vmatprep.subr.bf16.mxu0 0
    %190 = vmatpush2.bf16.msra.mxu0 0
    %191 = vmatprep.subr.bf16.mxu0 0
    %192 = vmatpush2.bf16.msra.mxu0 0
    %193 = vmatprep.subr.bf16.mxu0 0
    %194 = vmatpush2.bf16.msra.mxu0 0
    %195 = vmatprep.subr.bf16.mxu0 0
    %196 = vmatpush2.bf16.msra.mxu0 0
    %197 = vmatprep.mubr.bf16.mxu0 0
    %198 = vmatmul.mubr.bf16.gmra.mxu0 %v109
    %v199 = vpop.f32.mrf.mxu0
    %v200 = vadd.f32 %v95, %v199
    %v201 = vpop.f32.mrf.mxu0
    %v202 = vpop.f32.mrf.mxu0
    %v203 = vpop.f32.mrf.mxu0
    %204 = vdwg.mxu0
    %vm205 = vcmp.ge.f32.partialorder %v159, 0.0
    %vm206 = vcmp.ge.f32.partialorder %v161, 0.0
    %vm207 = vcmp.ge.f32.partialorder %v200, 0.0
    %v208 = vmul.f32 %v159, 0.01
    %v209 = vmul.f32 %v161, 0.01
    %v210 = vmul.f32 %v200, 0.01
    %v211 = vsel %vm205, %v159, %v208
    %v212 = vsel %vm206, %v161, %v209
    %v213 = vsel %vm207, %v200, %v210
    %v214 = vpack.c.bf16 %v211, %v211
    %v215 = vpack.c.bf16 %v212, %v212
    %v216 = vpack.c.bf16 %v213, %v213
    %v217 = vld [vmem:[#allocation6] sm:$0xff]
    %v218 = vld [vmem:[#allocation6 + $0x8] sm:$0xff]
    %v219 = vld [vmem:[#allocation6 + $0x10] sm:$0xff]
    %v220 = vld [vmem:[#allocation6 + $0x18] sm:$0xff]
    %v221 = vld [vmem:[#allocation6 + $0x20] sm:$0xff]
    %v222 = vld [vmem:[#allocation6 + $0x28] sm:$0xff]
    %v223 = vld [vmem:[#allocation6 + $0x30] sm:$0xff]
    %v224 = vld [vmem:[#allocation6 + $0x38] sm:$0xff]
    %v225 = vld [vmem:[#allocation6 + $0x40] sm:$0xff]
    %v226 = vld [vmem:[#allocation6 + $0x48] sm:$0xff]
    %v227 = vld [vmem:[#allocation6 + $0x50] sm:$0xff]
    %v228 = vld [vmem:[#allocation6 + $0x58] sm:$0xff]
    %v229 = vld [vmem:[#allocation6 + $0x60] sm:$0xff]
    %v230 = vld [vmem:[#allocation6 + $0x68] sm:$0xff]
    %v231 = vld [vmem:[#allocation6 + $0x70] sm:$0xff]
    %v232 = vld [vmem:[#allocation6 + $0x78] sm:$0xff]
    %v233 = vld [vmem:[#allocation6 + $0x80] sm:$0xff]
    %v234 = vld [vmem:[#allocation6 + $0x88] sm:$0xff]
    %v235 = vld [vmem:[#allocation6 + $0x90] sm:$0xff]
    %v236 = vld [vmem:[#allocation6 + $0x98] sm:$0xff]
    %v237 = vld [vmem:[#allocation6 + $0xa0] sm:$0xff]
    %v238 = vld [vmem:[#allocation6 + $0xa8] sm:$0xff]
    %v239 = vld [vmem:[#allocation6 + $0xb0] sm:$0xff]
    %v240 = vld [vmem:[#allocation6 + $0xb8] sm:$0xff]
    %v241 = vld [vmem:[#allocation6 + $0xc0] sm:$0xff]
    %v242 = vld [vmem:[#allocation6 + $0xc8] sm:$0xff]
    %v243 = vld [vmem:[#allocation6 + $0xd0] sm:$0xff]
    %v244 = vld [vmem:[#allocation6 + $0xd8] sm:$0xff]
    %v245 = vld [vmem:[#allocation6 + $0xe0] sm:$0xff]
    %v246 = vld [vmem:[#allocation6 + $0xe8] sm:$0xff]
    %v247 = vld [vmem:[#allocation6 + $0xf0] sm:$0xff]
    %v248 = vld [vmem:[#allocation6 + $0xf8] sm:$0xff]
    %v249 = vld [vmem:[#allocation6 + $0x100] sm:$0xff]
    %v250 = vld [vmem:[#allocation6 + $0x108] sm:$0xff]
    %v251 = vld [vmem:[#allocation6 + $0x110] sm:$0xff]
    %v252 = vld [vmem:[#allocation6 + $0x118] sm:$0xff]
    %v253 = vld [vmem:[#allocation6 + $0x120] sm:$0xff]
    %v254 = vld [vmem:[#allocation6 + $0x128] sm:$0xff]
    %v255 = vld [vmem:[#allocation6 + $0x130] sm:$0xff]
    %v256 = vld [vmem:[#allocation6 + $0x138] sm:$0xff]
    %v257 = vld [vmem:[#allocation6 + $0x140] sm:$0xff]
    %v258 = vld [vmem:[#allocation6 + $0x148] sm:$0xff]
    %v259 = vld [vmem:[#allocation6 + $0x150] sm:$0xff]
    %v260 = vld [vmem:[#allocation6 + $0x158] sm:$0xff]
    %v261 = vld [vmem:[#allocation6 + $0x160] sm:$0xff]
    %v262 = vld [vmem:[#allocation6 + $0x168] sm:$0xff]
    %v263 = vld [vmem:[#allocation6 + $0x170] sm:$0xff]
    %v264 = vld [vmem:[#allocation6 + $0x178] sm:$0xff]
    %v265 = vld [vmem:[%s4] sm:$0x3]
    %v267 = vlaneseq
    %v268 = vshrl.u32 %v267, 7
    %v269 = vsub.s32 0, %v268
    %v270 = vrot.slane %v265, %v269
    %v271 = vlaneseq
    %v272 = vshrl.u32 %v271, 7
    %v273 = vsub.s32 1, %v272
    %v274 = vrot.slane %v265, %v273
    %v325 = vunpack.c.l.b16 %v217
    %v326 = vunpack.c.h.b16 %v217
    %v327 = vunpack.c.l.b16 %v218
    %v328 = vunpack.c.h.b16 %v218
    %v329 = vunpack.c.l.b16 %v219
    %v330 = vunpack.c.h.b16 %v219
    %v331 = vunpack.c.l.b16 %v220
    %v332 = vunpack.c.h.b16 %v220
    %v333 = vunpack.c.l.b16 %v221
    %v334 = vunpack.c.h.b16 %v221
    %v335 = vunpack.c.l.b16 %v222
    %v336 = vunpack.c.h.b16 %v222
    %v337 = vunpack.c.l.b16 %v223
    %v338 = vunpack.c.h.b16 %v223
    %v339 = vunpack.c.l.b16 %v224
    %v340 = vunpack.c.h.b16 %v224
    %v341 = vunpack.c.l.b16 %v225
    %v342 = vunpack.c.h.b16 %v225
    %v343 = vunpack.c.l.b16 %v226
    %v344 = vunpack.c.h.b16 %v226
    %v345 = vunpack.c.l.b16 %v227
    %v346 = vunpack.c.h.b16 %v227
    %v347 = vunpack.c.l.b16 %v228
    %v348 = vunpack.c.h.b16 %v228
    %v349 = vunpack.c.l.b16 %v229
    %v350 = vunpack.c.h.b16 %v229
    %v351 = vunpack.c.l.b16 %v230
    %v352 = vunpack.c.h.b16 %v230
    %v353 = vunpack.c.l.b16 %v231
    %v354 = vunpack.c.h.b16 %v231
    %v355 = vunpack.c.l.b16 %v232
    %v356 = vunpack.c.h.b16 %v232
    %v357 = vunpack.c.l.b16 %v233
    %v358 = vunpack.c.h.b16 %v233
    %v359 = vunpack.c.l.b16 %v234
    %v360 = vunpack.c.h.b16 %v234
    %v361 = vunpack.c.l.b16 %v235
    %v362 = vunpack.c.h.b16 %v235
    %v363 = vunpack.c.l.b16 %v236
    %v364 = vunpack.c.h.b16 %v236
    %v365 = vunpack.c.l.b16 %v237
    %v366 = vunpack.c.h.b16 %v237
    %v367 = vunpack.c.l.b16 %v238
    %v368 = vunpack.c.h.b16 %v238
    %v369 = vunpack.c.l.b16 %v239
    %v370 = vunpack.c.h.b16 %v239
    %v371 = vunpack.c.l.b16 %v240
    %v372 = vunpack.c.h.b16 %v240
    %v373 = vunpack.c.l.b16 %v241
    %v374 = vunpack.c.h.b16 %v241
    %v375 = vunpack.c.l.b16 %v242
    %v376 = vunpack.c.h.b16 %v242
    %v377 = vunpack.c.l.b16 %v243
    %v378 = vunpack.c.h.b16 %v243
    %v379 = vunpack.c.l.b16 %v244
    %v380 = vunpack.c.h.b16 %v244
    %v381 = vunpack.c.l.b16 %v245
    %v382 = vunpack.c.h.b16 %v245
    %v383 = vunpack.c.l.b16 %v246
    %v384 = vunpack.c.h.b16 %v246
    %v385 = vunpack.c.l.b16 %v247
    %v386 = vunpack.c.h.b16 %v247
    %v387 = vunpack.c.l.b16 %v248
    %v388 = vunpack.c.h.b16 %v248
    %v389 = vunpack.c.l.b16 %v249
    %v390 = vunpack.c.h.b16 %v249
    %v391 = vunpack.c.l.b16 %v250
    %v392 = vunpack.c.h.b16 %v250
    %v393 = vunpack.c.l.b16 %v251
    %v394 = vunpack.c.h.b16 %v251
    %v395 = vunpack.c.l.b16 %v252
    %v396 = vunpack.c.h.b16 %v252
    %v397 = vunpack.c.l.b16 %v253
    %v398 = vunpack.c.h.b16 %v253
    %v399 = vunpack.c.l.b16 %v254
    %v400 = vunpack.c.h.b16 %v254
    %v401 = vunpack.c.l.b16 %v255
    %v402 = vunpack.c.h.b16 %v255
    %v403 = vunpack.c.l.b16 %v256
    %v404 = vunpack.c.h.b16 %v256
    %v405 = vunpack.c.l.b16 %v257
    %v406 = vunpack.c.h.b16 %v257
    %v407 = vunpack.c.l.b16 %v258
    %v408 = vunpack.c.h.b16 %v258
    %v409 = vunpack.c.l.b16 %v259
    %v410 = vunpack.c.h.b16 %v259
    %v411 = vunpack.c.l.b16 %v260
    %v412 = vunpack.c.h.b16 %v260
    %v413 = vunpack.c.l.b16 %v261
    %v414 = vunpack.c.h.b16 %v261
    %v415 = vunpack.c.l.b16 %v262
    %v416 = vunpack.c.h.b16 %v262
    %v417 = vunpack.c.l.b16 %v263
    %v418 = vunpack.c.h.b16 %v263
    %v419 = vunpack.c.l.b16 %v264
    %v420 = vunpack.c.h.b16 %v264
    %v421 = vpack.c.b16 %v327, %v325
    %v422 = vpack.c.b16 %v328, %v326
    %v423 = vpack.c.b16 %v331, %v329
    %v424 = vpack.c.b16 %v332, %v330
    %v425 = vpack.c.b16 %v335, %v333
    %v426 = vpack.c.b16 %v336, %v334
    %v427 = vpack.c.b16 %v339, %v337
    %v428 = vpack.c.b16 %v340, %v338
    %v429 = vpack.c.b16 %v343, %v341
    %v430 = vpack.c.b16 %v344, %v342
    %v431 = vpack.c.b16 %v347, %v345
    %v432 = vpack.c.b16 %v348, %v346
    %v433 = vpack.c.b16 %v351, %v349
    %v434 = vpack.c.b16 %v352, %v350
    %v435 = vpack.c.b16 %v355, %v353
    %v436 = vpack.c.b16 %v356, %v354
    %v437 = vpack.c.b16 %v359, %v357
    %v438 = vpack.c.b16 %v360, %v358
    %v439 = vpack.c.b16 %v363, %v361
    %v440 = vpack.c.b16 %v364, %v362
    %v441 = vpack.c.b16 %v367, %v365
    %v442 = vpack.c.b16 %v368, %v366
    %v443 = vpack.c.b16 %v371, %v369
    %v444 = vpack.c.b16 %v372, %v370
    %v445 = vpack.c.b16 %v375, %v373
    %v446 = vpack.c.b16 %v376, %v374
    %v447 = vpack.c.b16 %v379, %v377
    %v448 = vpack.c.b16 %v380, %v378
    %v449 = vpack.c.b16 %v383, %v381
    %v450 = vpack.c.b16 %v384, %v382
    %v451 = vpack.c.b16 %v387, %v385
    %v452 = vpack.c.b16 %v388, %v386
    %v453 = vpack.c.b16 %v391, %v389
    %v454 = vpack.c.b16 %v392, %v390
    %v455 = vpack.c.b16 %v395, %v393
    %v456 = vpack.c.b16 %v396, %v394
    %v457 = vpack.c.b16 %v399, %v397
    %v458 = vpack.c.b16 %v400, %v398
    %v459 = vpack.c.b16 %v403, %v401
    %v460 = vpack.c.b16 %v404, %v402
    %v461 = vpack.c.b16 %v407, %v405
    %v462 = vpack.c.b16 %v408, %v406
    %v463 = vpack.c.b16 %v411, %v409
    %v464 = vpack.c.b16 %v412, %v410
    %v465 = vpack.c.b16 %v415, %v413
    %v466 = vpack.c.b16 %v416, %v414
    %v467 = vpack.c.b16 %v419, %v417
    %v468 = vpack.c.b16 %v420, %v418
    %517 = vmatprep.subr.bf16.mxu0 %v436
    %518 = vmatpush1.bf16.msra.mxu0 %v435
    %519 = vmatprep.subr.bf16.mxu0 %v434
    %520 = vmatpush1.bf16.msra.mxu0 %v433
    %521 = vmatprep.subr.bf16.mxu0 %v432
    %522 = vmatpush1.bf16.msra.mxu0 %v431
    %523 = vmatprep.subr.bf16.mxu0 %v430
    %524 = vmatpush1.bf16.msra.mxu0 %v429
    %525 = vmatprep.subr.bf16.mxu0 %v428
    %526 = vmatpush1.bf16.msra.mxu0 %v427
    %527 = vmatprep.subr.bf16.mxu0 %v426
    %528 = vmatpush1.bf16.msra.mxu0 %v425
    %529 = vmatprep.subr.bf16.mxu0 %v424
    %530 = vmatpush1.bf16.msra.mxu0 %v423
    %531 = vmatprep.subr.bf16.mxu0 %v422
    %532 = vmatpush1.bf16.msra.mxu0 %v421
    %533 = vmatprep.subr.bf16.mxu0 %v452
    %534 = vmatpush2.bf16.msra.mxu0 %v451
    %535 = vmatprep.subr.bf16.mxu0 %v450
    %536 = vmatpush2.bf16.msra.mxu0 %v449
    %537 = vmatprep.subr.bf16.mxu0 %v448
    %538 = vmatpush2.bf16.msra.mxu0 %v447
    %539 = vmatprep.subr.bf16.mxu0 %v446
    %540 = vmatpush2.bf16.msra.mxu0 %v445
    %541 = vmatprep.subr.bf16.mxu0 %v444
    %542 = vmatpush2.bf16.msra.mxu0 %v443
    %543 = vmatprep.subr.bf16.mxu0 %v442
    %544 = vmatpush2.bf16.msra.mxu0 %v441
    %545 = vmatprep.subr.bf16.mxu0 %v440
    %546 = vmatpush2.bf16.msra.mxu0 %v439
    %547 = vmatprep.subr.bf16.mxu0 %v438
    %548 = vmatpush2.bf16.msra.mxu0 %v437
    %549 = vmatprep.mubr.bf16.mxu0 %v215
    %550 = vmatmul.mubr.bf16.gmra.mxu0 %v214
    %v551 = vpop.f32.mrf.mxu0
    %v552 = vadd.f32 %v270, %v551
    %v553 = vpop.f32.mrf.mxu0
    %v554 = vadd.f32 %v274, %v553
    %v555 = vpop.f32.mrf.mxu0
    %v556 = vpop.f32.mrf.mxu0
    %557 = vdwg.mxu0
    %558 = vmatprep.subr.bf16.mxu0 %v468
    %559 = vmatpush1.bf16.msra.mxu0 %v467
    %560 = vmatprep.subr.bf16.mxu0 %v466
    %561 = vmatpush1.bf16.msra.mxu0 %v465
    %562 = vmatprep.subr.bf16.mxu0 %v464
    %563 = vmatpush1.bf16.msra.mxu0 %v463
    %564 = vmatprep.subr.bf16.mxu0 %v462
    %565 = vmatpush1.bf16.msra.mxu0 %v461
    %566 = vmatprep.subr.bf16.mxu0 %v460
    %567 = vmatpush1.bf16.msra.mxu0 %v459
    %568 = vmatprep.subr.bf16.mxu0 %v458
    %569 = vmatpush1.bf16.msra.mxu0 %v457
    %570 = vmatprep.subr.bf16.mxu0 %v456
    %571 = vmatpush1.bf16.msra.mxu0 %v455
    %572 = vmatprep.subr.bf16.mxu0 %v454
    %573 = vmatpush1.bf16.msra.mxu0 %v453
    %574 = vmatprep.subr.bf16.mxu0 0
    %575 = vmatpush2.bf16.msra.mxu0 0
    %576 = vmatprep.subr.bf16.mxu0 0
    %577 = vmatpush2.bf16.msra.mxu0 0
    %578 = vmatprep.subr.bf16.mxu0 0
    %579 = vmatpush2.bf16.msra.mxu0 0
    %580 = vmatprep.subr.bf16.mxu0 0
    %581 = vmatpush2.bf16.msra.mxu0 0
    %582 = vmatprep.subr.bf16.mxu0 0
    %583 = vmatpush2.bf16.msra.mxu0 0
    %584 = vmatprep.subr.bf16.mxu0 0
    %585 = vmatpush2.bf16.msra.mxu0 0
    %586 = vmatprep.subr.bf16.mxu0 0
    %587 = vmatpush2.bf16.msra.mxu0 0
    %588 = vmatprep.subr.bf16.mxu0 0
    %589 = vmatpush2.bf16.msra.mxu0 0
    %590 = vmatprep.mubr.bf16.mxu0 0
    %591 = vmatmul.mubr.bf16.gmra.mxu0 %v216
    %v592 = vpop.f32.mrf.mxu0
    %v593 = vadd.f32 %v552, %v592
    %v594 = vpop.f32.mrf.mxu0
    %v595 = vadd.f32 %v554, %v594
    %v596 = vpop.f32.mrf.mxu0
    %v597 = vpop.f32.mrf.mxu0
    %598 = vdwg.mxu0
    %vm599 = vcmp.ge.f32.partialorder %v593, 0.0
    %vm600 = vcmp.ge.f32.partialorder %v595, 0.0
    %v601 = vmul.f32 %v593, 0.01
    %v602 = vmul.f32 %v595, 0.01
    %v603 = vsel %vm599, %v593, %v601
    %v604 = vsel %vm600, %v595, %v602
    %v605 = vpack.c.bf16 %v603, %v603
    %v606 = vpack.c.bf16 %v604, %v604
    %v607 = vld [vmem:[#allocation7] sm:$0xf]
    %v608 = vld [vmem:[#allocation7 + $0x4] sm:$0xf]
    %v609 = vld [vmem:[#allocation7 + $0x8] sm:$0xf]
    %v610 = vld [vmem:[#allocation7 + $0xc] sm:$0xf]
    %v611 = vld [vmem:[#allocation7 + $0x10] sm:$0xf]
    %v612 = vld [vmem:[#allocation7 + $0x14] sm:$0xf]
    %v613 = vld [vmem:[#allocation7 + $0x18] sm:$0xf]
    %v614 = vld [vmem:[#allocation7 + $0x1c] sm:$0xf]
    %v615 = vld [vmem:[#allocation7 + $0x20] sm:$0xf]
    %v616 = vld [vmem:[#allocation7 + $0x24] sm:$0xf]
    %v617 = vld [vmem:[#allocation7 + $0x28] sm:$0xf]
    %v618 = vld [vmem:[#allocation7 + $0x2c] sm:$0xf]
    %v619 = vld [vmem:[#allocation7 + $0x30] sm:$0xf]
    %v620 = vld [vmem:[#allocation7 + $0x34] sm:$0xf]
    %v621 = vld [vmem:[#allocation7 + $0x38] sm:$0xf]
    %v622 = vld [vmem:[#allocation7 + $0x3c] sm:$0xf]
    %v623 = vld [vmem:[#allocation7 + $0x40] sm:$0xf]
    %v624 = vld [vmem:[#allocation7 + $0x44] sm:$0xf]
    %v625 = vld [vmem:[#allocation7 + $0x48] sm:$0xf]
    %v626 = vld [vmem:[#allocation7 + $0x4c] sm:$0xf]
    %v627 = vld [vmem:[#allocation7 + $0x50] sm:$0xf]
    %v628 = vld [vmem:[#allocation7 + $0x54] sm:$0xf]
    %v629 = vld [vmem:[#allocation7 + $0x58] sm:$0xf]
    %v630 = vld [vmem:[#allocation7 + $0x5c] sm:$0xf]
    %v631 = vld [vmem:[#allocation7 + $0x60] sm:$0xf]
    %v632 = vld [vmem:[#allocation7 + $0x64] sm:$0xf]
    %v633 = vld [vmem:[#allocation7 + $0x68] sm:$0xf]
    %v634 = vld [vmem:[#allocation7 + $0x6c] sm:$0xf]
    %v635 = vld [vmem:[#allocation7 + $0x70] sm:$0xf]
    %v636 = vld [vmem:[#allocation7 + $0x74] sm:$0xf]
    %v637 = vld [vmem:[#allocation7 + $0x78] sm:$0xf]
    %v638 = vld [vmem:[#allocation7 + $0x7c] sm:$0xf]
    %v639 = vld [vmem:[%s6] sm:$0x1]
    %v641 = vlaneseq
    %v642 = vshrl.u32 %v641, 7
    %v643 = vsub.s32 0, %v642
    %v644 = vrot.slane %v639, %v643
    %v678 = vunpack.c.l.b16 %v607
    %v679 = vunpack.c.l.b16 %v608
    %v680 = vunpack.c.l.b16 %v609
    %v681 = vunpack.c.l.b16 %v610
    %v682 = vunpack.c.l.b16 %v611
    %v683 = vunpack.c.l.b16 %v612
    %v684 = vunpack.c.l.b16 %v613
    %v685 = vunpack.c.l.b16 %v614
    %v686 = vunpack.c.l.b16 %v615
    %v687 = vunpack.c.l.b16 %v616
    %v688 = vunpack.c.l.b16 %v617
    %v689 = vunpack.c.l.b16 %v618
    %v690 = vunpack.c.l.b16 %v619
    %v691 = vunpack.c.l.b16 %v620
    %v692 = vunpack.c.l.b16 %v621
    %v693 = vunpack.c.l.b16 %v622
    %v694 = vunpack.c.l.b16 %v623
    %v695 = vunpack.c.l.b16 %v624
    %v696 = vunpack.c.l.b16 %v625
    %v697 = vunpack.c.l.b16 %v626
    %v698 = vunpack.c.l.b16 %v627
    %v699 = vunpack.c.l.b16 %v628
    %v700 = vunpack.c.l.b16 %v629
    %v701 = vunpack.c.l.b16 %v630
    %v702 = vunpack.c.l.b16 %v631
    %v703 = vunpack.c.l.b16 %v632
    %v704 = vunpack.c.l.b16 %v633
    %v705 = vunpack.c.l.b16 %v634
    %v706 = vunpack.c.l.b16 %v635
    %v707 = vunpack.c.l.b16 %v636
    %v708 = vunpack.c.l.b16 %v637
    %v709 = vunpack.c.l.b16 %v638
    %v710 = vpack.c.b16 %v679, %v678
    %v711 = vpack.c.b16 %v681, %v680
    %v712 = vpack.c.b16 %v683, %v682
    %v713 = vpack.c.b16 %v685, %v684
    %v714 = vpack.c.b16 %v687, %v686
    %v715 = vpack.c.b16 %v689, %v688
    %v716 = vpack.c.b16 %v691, %v690
    %v717 = vpack.c.b16 %v693, %v692
    %v718 = vpack.c.b16 %v695, %v694
    %v719 = vpack.c.b16 %v697, %v696
    %v720 = vpack.c.b16 %v699, %v698
    %v721 = vpack.c.b16 %v701, %v700
    %v722 = vpack.c.b16 %v703, %v702
    %v723 = vpack.c.b16 %v705, %v704
    %v724 = vpack.c.b16 %v707, %v706
    %v725 = vpack.c.b16 %v709, %v708
    %742 = vmatprep.subr.bf16.mxu0 0
    %743 = vmatpush1.bf16.msra.mxu0 %v717
    %744 = vmatprep.subr.bf16.mxu0 0
    %745 = vmatpush1.bf16.msra.mxu0 %v716
    %746 = vmatprep.subr.bf16.mxu0 0
    %747 = vmatpush1.bf16.msra.mxu0 %v715
    %748 = vmatprep.subr.bf16.mxu0 0
    %749 = vmatpush1.bf16.msra.mxu0 %v714
    %750 = vmatprep.subr.bf16.mxu0 0
    %751 = vmatpush1.bf16.msra.mxu0 %v713
    %752 = vmatprep.subr.bf16.mxu0 0
    %753 = vmatpush1.bf16.msra.mxu0 %v712
    %754 = vmatprep.subr.bf16.mxu0 0
    %755 = vmatpush1.bf16.msra.mxu0 %v711
    %756 = vmatprep.subr.bf16.mxu0 0
    %757 = vmatpush1.bf16.msra.mxu0 %v710
    %758 = vmatprep.subr.bf16.mxu0 0
    %759 = vmatpush2.bf16.msra.mxu0 %v725
    %760 = vmatprep.subr.bf16.mxu0 0
    %761 = vmatpush2.bf16.msra.mxu0 %v724
    %762 = vmatprep.subr.bf16.mxu0 0
    %763 = vmatpush2.bf16.msra.mxu0 %v723
    %764 = vmatprep.subr.bf16.mxu0 0
    %765 = vmatpush2.bf16.msra.mxu0 %v722
    %766 = vmatprep.subr.bf16.mxu0 0
    %767 = vmatpush2.bf16.msra.mxu0 %v721
    %768 = vmatprep.subr.bf16.mxu0 0
    %769 = vmatpush2.bf16.msra.mxu0 %v720
    %770 = vmatprep.subr.bf16.mxu0 0
    %771 = vmatpush2.bf16.msra.mxu0 %v719
    %772 = vmatprep.subr.bf16.mxu0 0
    %773 = vmatpush2.bf16.msra.mxu0 %v718
    %774 = vmatprep.mubr.bf16.mxu0 %v606
    %775 = vmatmul.mubr.bf16.gmra.mxu0 %v605
    %v776 = vpop.f32.mrf.mxu0
    %v777 = vadd.f32 %v644, %v776
    %v778 = vpop.f32.mrf.mxu0
    %v779 = vpop.f32.mrf.mxu0
    %v780 = vpop.f32.mrf.mxu0
    %781 = vdwg.mxu0
    %vm782 = vcmask 23552
    %783 = vst.msk [vmem:[%s7] sm:$0xff] %vm782, %v777
    // Predicated region
    $region46: #{simpnn_forward.1} parent=1 // pred_check
      _
    $region47: #{simpnn_forward.1} parent=1 // pred_check_branch
      %785 = sbr.rel (0) target = $region49
    $region48: #{simpnn_forward.1} parent=1 // pred_region
      _
    $region49: #{simpnn_forward.1} parent=1 // pred_fallthru
      _
    // Predicated region
    $region50: #{simpnn_forward.1} parent=1 // pred_check
      _
    $region51: #{simpnn_forward.1} parent=1 // pred_check_branch
      %787 = sbr.rel (0) target = $region53
    $region52: #{simpnn_forward.1} parent=1 // pred_region
      _
    $region53: #{simpnn_forward.1} parent=1 // pred_fallthru
      _
    %788 = vsyncpa [#allocation3], 1
    %789 = vsyncpa [#allocation5], 1
    %790 = vsyncpa [#allocation8], 1

</llo_original>
